<compile_context>
chip_gen: v6e
topology: v6e:2x2x1
jax: 0.10.0
libtpu: 0.0.40
codegen_flags: <defaults>
</compile_context>

<pallas_src>
import functools

import jax
import jax.numpy as jnp
from jax import lax
from jax.experimental import pallas as pl
from jax.experimental.pallas import tpu as pltpu


def _round_up(x, m):
    return ((x + m - 1) // m) * m


def sublayer_connection_kernel(
    seed_ref,            # SMEM scalar-prefetch: (1,) int32 dropout seed
    x_ref,               # (TM, D)   input tile
    a2_ref,              # (1, D)    LayerNorm scale
    b2_ref,              # (1, D)    LayerNorm shift
    w_ref,               # (D, D)    sublayer Linear weight (bf16, applied as x @ W)
    bias_ref,            # (1, D)    sublayer Linear bias (f32)
    o_ref,               # (TM, D)   output tile
    *,
    features: int,
    eps: float,
    dropout_p: float,
):
    i = pl.program_id(0)
    tm = x_ref.shape[0]

    x = x_ref[...].astype(jnp.float32)                       # (TM, D)

    # ---- LayerNorm (torch-style: unbiased std, eps added to std) ----------
    mean = jnp.mean(x, axis=-1, keepdims=True)
    xc = x - mean
    var_unbiased = jnp.sum(xc * xc, axis=-1, keepdims=True) * (1.0 / (features - 1))
    std = jnp.sqrt(var_unbiased)
    inv = 1.0 / (std + eps)                                   # reciprocal -> EUP
    normed = a2_ref[...] * (xc * inv) + b2_ref[...]           # (TM, D), f32

    # ---- sublayer: Linear(size, size) on the MXU (bf16 in, f32 accumulate)
    sub = jnp.dot(normed.astype(w_ref.dtype), w_ref[...],
                  preferred_element_type=jnp.float32)
    sub = sub + bias_ref[...]

    # ---- inverted dropout: counter-based hash, pure-uint32 keep test -------
    if dropout_p > 0.0:
        seed_u = seed_ref[0].astype(jnp.uint32)
        row0 = (i * tm).astype(jnp.uint32)
        r = lax.broadcasted_iota(jnp.uint32, sub.shape, 0) + row0
        c = lax.broadcasted_iota(jnp.uint32, sub.shape, 1)
        v = (r * jnp.uint32(0x9E3779B1)
             + c * jnp.uint32(0x85EBCA77)
             + seed_u * jnp.uint32(0xC2B2AE3D))
        # murmur3 finalizer -> well-mixed uniform bits
        v = v ^ (v >> 16)
        v = v * jnp.uint32(0x85EBCA6B)
        v = v ^ (v >> 13)
        v = v * jnp.uint32(0xC2B2AE35)
        v = v ^ (v >> 16)
        # keep iff uniform32 >= p * 2^32  (single unsigned compare)
        threshold = jnp.uint32(min(int(dropout_p * (1 << 32)), (1 << 32) - 1))
        keep = v >= threshold
        sub = jnp.where(keep, sub * (1.0 / (1.0 - dropout_p)), 0.0)

    # ---- residual add, single store ----------------------------------------
    o_ref[...] = (x + sub).astype(o_ref.dtype)


def sublayer_connection(x2d, a2, b2, w, bias, seed, *,
                        eps=1e-6, dropout_p=0.1, tile_rows=256):
    rows, d = x2d.shape
    assert d % 128 == 0, "feature dim must be a multiple of 128 (lane dim)"

    # Effective row tile: multiple of 8, no larger than the (padded) row count.
    tm = max(8, min(_round_up(tile_rows, 8), _round_up(rows, 8)))
    padded_rows = _round_up(rows, tm)
    x_in = x2d if padded_rows == rows else jnp.pad(
        x2d, ((0, padded_rows - rows), (0, 0)))

    # bf16 weights: higher MXU throughput, half the W DMA / VMEM footprint.
    w_bf16 = w.astype(jnp.bfloat16)
    bias_f32 = bias.astype(jnp.float32)
    a2_f32 = a2.astype(jnp.float32)
    b2_f32 = b2.astype(jnp.float32)

    kernel = functools.partial(
        sublayer_connection_kernel,
        features=d, eps=eps, dropout_p=dropout_p,
    )

    grid_spec = pltpu.PrefetchScalarGridSpec(
        num_scalar_prefetch=1,
        grid=(padded_rows // tm,),
        in_specs=[
            pl.BlockSpec((tm, d), lambda i, seed: (i, 0)),   # x
            pl.BlockSpec((1, d),  lambda i, seed: (0, 0)),   # a_2
            pl.BlockSpec((1, d),  lambda i, seed: (0, 0)),   # b_2
            pl.BlockSpec((d, d),  lambda i, seed: (0, 0)),   # W (bf16)
            pl.BlockSpec((1, d),  lambda i, seed: (0, 0)),   # bias
        ],
        out_specs=pl.BlockSpec((tm, d), lambda i, seed: (i, 0)),
    )

    # VMEM budget: double-buffered x/out tiles + (constant-index) W + vectors.
    itemsize = jnp.dtype(x2d.dtype).itemsize
    vmem_est = (2 * tm * d * itemsize            # x tiles (double-buffered)
                + 2 * tm * d * itemsize          # out tiles
                + 2 * d * d * 2                  # W (bf16)
                + 2 * 3 * d * 4)                 # a2 / b2 / bias
    vmem_limit = min(128 * 1024 * 1024,
                     max(32 * 1024 * 1024, int(1.5 * vmem_est) + (1 << 20)))

    out = pl.pallas_call(
        kernel,
        out_shape=jax.ShapeDtypeStruct((padded_rows, d), x2d.dtype),
        grid_spec=grid_spec,
        compiler_params=pltpu.CompilerParams(
            # Dropout bits depend only on (absolute row, col, seed), so grid
            # order is irrelevant -> safe to shard rows across both TCs.
            dimension_semantics=("parallel",),
            vmem_limit_bytes=vmem_limit,
        ),
    )(seed, x_in, a2_f32, b2_f32, w_bf16, bias_f32)

    return out[:rows]


if __name__ == "__main__":
    batch, seq, hidden = 2, 8, 128     # "size" = 128
    dropout_p = 0.1
    eps = 1e-6

    key = jax.random.PRNGKey(0)
    kx, kw, kb = jax.random.split(key, 3)

    # input
    x = jax.random.normal(kx, (batch, seq, hidden), dtype=jnp.float32)

    # LayerNorm params (as in __init__: ones / zeros)
    a2 = jnp.ones((1, hidden), dtype=jnp.float32)
    b2 = jnp.zeros((1, hidden), dtype=jnp.float32)

    # deterministic synthetic sublayer = Linear(hidden, hidden)
    w = jax.random.normal(kw, (hidden, hidden), dtype=jnp.float32) * 0.02
    bias = jax.random.normal(kb, (1, hidden), dtype=jnp.float32) * 0.01

    seed = jnp.array([1234], dtype=jnp.int32)   # deterministic dropout seed

    x2d = x.reshape(batch * seq, hidden)
    out2d = sublayer_connection(x2d, a2, b2, w, bias, seed,
                                eps=eps, dropout_p=dropout_p)
    out = out2d.reshape(batch, seq, hidden)
    jax.block_until_ready(out)

    assert out.shape == (batch, seq, hidden)
    assert bool(jnp.all(jnp.isfinite(out)))
    print("KERNEL_OK")
</pallas_src>

<mosaic_0001>
module attributes {stable_mosaic.version = 11 : i64} {
  func.func @sublayer_connection_kernel(%arg0: i32, %arg1: memref<1xi32, #tpu.memory_space<smem>>, %arg2: memref<16x128xf32, #tpu.memory_space<vmem>>, %arg3: memref<1x128xf32, #tpu.memory_space<vmem>>, %arg4: memref<1x128xf32, #tpu.memory_space<vmem>>, %arg5: memref<128x128xbf16, #tpu.memory_space<vmem>>, %arg6: memref<1x128xf32, #tpu.memory_space<vmem>>, %arg7: memref<16x128xf32, #tpu.memory_space<vmem>>) attributes {dimension_semantics = [#tpu.dimension_semantics<parallel>], iteration_bounds = array<i64: 1>, scalar_prefetch = 1 : i64, scratch_operands = 0 : i64, tpu.core_type = #tpu.core_type<tc>, window_params = [{transform_indices = @transform_0, window_bounds = array<i64: 16, 128>}, {pipeline_mode = #tpu.pipeline_mode<synchronous>, transform_indices = @transform_1, window_bounds = array<i64: 1, 128>}, {pipeline_mode = #tpu.pipeline_mode<synchronous>, transform_indices = @transform_2, window_bounds = array<i64: 1, 128>}, {pipeline_mode = #tpu.pipeline_mode<synchronous>, transform_indices = @transform_3, window_bounds = array<i64: 128, 128>}, {pipeline_mode = #tpu.pipeline_mode<synchronous>, transform_indices = @transform_4, window_bounds = array<i64: 1, 128>}, {transform_indices = @transform_5, window_bounds = array<i64: 16, 128>}]} {
    %c0 = arith.constant 0 : index
    %c0_0 = arith.constant 0 : index
    %0 = vector.load %arg2[%c0, %c0_0] : memref<16x128xf32, #tpu.memory_space<vmem>>, vector<16x128xf32>
    %cst = arith.constant dense<0.000000e+00> : vector<16xf32>
    %1 = vector.multi_reduction <add>, %0, %cst [1] : vector<16x128xf32> to vector<16xf32>
    %2 = vector.shape_cast %1 : vector<16xf32> to vector<16x1xf32>
    %cst_1 = arith.constant 1.280000e+02 : f32
    %3 = vector.broadcast %cst_1 : f32 to vector<16x1xf32>
    %4 = arith.divf %2, %3 : vector<16x1xf32>
    %5 = vector.broadcast %4 : vector<16x1xf32> to vector<16x128xf32>
    %6 = arith.subf %0, %5 : vector<16x128xf32>
    %7 = arith.mulf %6, %6 : vector<16x128xf32>
    %cst_2 = arith.constant dense<0.000000e+00> : vector<16xf32>
    %8 = vector.multi_reduction <add>, %7, %cst_2 [1] : vector<16x128xf32> to vector<16xf32>
    %9 = vector.shape_cast %8 : vector<16xf32> to vector<16x1xf32>
    %cst_3 = arith.constant 0.00787401571 : f32
    %10 = vector.broadcast %cst_3 : f32 to vector<16x1xf32>
    %11 = arith.mulf %9, %10 : vector<16x1xf32>
    %12 = math.sqrt %11 : vector<16x1xf32>
    %cst_4 = arith.constant 9.99999997E-7 : f32
    %13 = vector.broadcast %cst_4 : f32 to vector<16x1xf32>
    %14 = arith.addf %12, %13 : vector<16x1xf32>
    %cst_5 = arith.constant 1.000000e+00 : f32
    %15 = vector.broadcast %cst_5 : f32 to vector<16x1xf32>
    %16 = arith.divf %15, %14 : vector<16x1xf32>
    %c0_6 = arith.constant 0 : index
    %c0_7 = arith.constant 0 : index
    %17 = vector.load %arg3[%c0_6, %c0_7] : memref<1x128xf32, #tpu.memory_space<vmem>>, vector<1x128xf32>
    %18 = vector.broadcast %16 : vector<16x1xf32> to vector<16x128xf32>
    %19 = arith.mulf %6, %18 : vector<16x128xf32>
    %20 = vector.broadcast %17 : vector<1x128xf32> to vector<16x128xf32>
    %21 = arith.mulf %20, %19 : vector<16x128xf32>
    %c0_8 = arith.constant 0 : index
    %c0_9 = arith.constant 0 : index
    %22 = vector.load %arg4[%c0_8, %c0_9] : memref<1x128xf32, #tpu.memory_space<vmem>>, vector<1x128xf32>
    %23 = vector.broadcast %22 : vector<1x128xf32> to vector<16x128xf32>
    %24 = arith.addf %21, %23 : vector<16x128xf32>
    %25 = arith.truncf %24 : vector<16x128xf32> to vector<16x128xbf16>
    %c0_10 = arith.constant 0 : index
    %c0_11 = arith.constant 0 : index
    %26 = vector.load %arg5[%c0_10, %c0_11] : memref<128x128xbf16, #tpu.memory_space<vmem>>, vector<128x128xbf16>
    %cst_12 = arith.constant dense<0.000000e+00> : vector<16x128xf32>
    %27 = tpu.matmul %25, %26, %cst_12 {dimension_numbers = #tpu.dot_dimension_numbers<[1], [0], [0], [1], [0, 0, 1, 1], [], []>} : vector<16x128xbf16>, vector<128x128xbf16>, vector<16x128xf32> -> vector<16x128xf32>
    %c0_13 = arith.constant 0 : index
    %c0_14 = arith.constant 0 : index
    %28 = vector.load %arg6[%c0_13, %c0_14] : memref<1x128xf32, #tpu.memory_space<vmem>>, vector<1x128xf32>
    %29 = vector.broadcast %28 : vector<1x128xf32> to vector<16x128xf32>
    %30 = arith.addf %27, %29 : vector<16x128xf32>
    %c0_15 = arith.constant 0 : index
    %31 = memref.load %arg1[%c0_15] : memref<1xi32, #tpu.memory_space<smem>>
    %c16_i32 = arith.constant 16 : i32
    %32 = arith.muli %arg0, %c16_i32 : i32
    %33 = tpu.iota {dimensions = array<i32: 0>} : vector<16x128xi32>
    %34 = vector.broadcast %32 : i32 to vector<16x128xi32>
    %35 = arith.addi %33, %34 : vector<16x128xi32>
    %36 = tpu.iota {dimensions = array<i32: 1>} : vector<16x128xi32>
    %c-1640531535_i32 = arith.constant -1640531535 : i32
    %37 = vector.broadcast %c-1640531535_i32 : i32 to vector<16x128xi32>
    %38 = arith.muli %35, %37 : vector<16x128xi32>
    %c-2048144777_i32 = arith.constant -2048144777 : i32
    %39 = vector.broadcast %c-2048144777_i32 : i32 to vector<16x128xi32>
    %40 = arith.muli %36, %39 : vector<16x128xi32>
    %41 = arith.addi %38, %40 : vector<16x128xi32>
    %c-1028477379_i32 = arith.constant -1028477379 : i32
    %42 = arith.muli %31, %c-1028477379_i32 : i32
    %43 = vector.broadcast %42 : i32 to vector<16x128xi32>
    %44 = arith.addi %41, %43 : vector<16x128xi32>
    %c16_i32_16 = arith.constant 16 : i32
    %45 = vector.broadcast %c16_i32_16 : i32 to vector<16x128xi32>
    %46 = arith.shrui %44, %45 : vector<16x128xi32>
    %47 = arith.xori %44, %46 : vector<16x128xi32>
    %c-2048144789_i32 = arith.constant -2048144789 : i32
    %48 = vector.broadcast %c-2048144789_i32 : i32 to vector<16x128xi32>
    %49 = arith.muli %47, %48 : vector<16x128xi32>
    %c13_i32 = arith.constant 13 : i32
    %50 = vector.broadcast %c13_i32 : i32 to vector<16x128xi32>
    %51 = arith.shrui %49, %50 : vector<16x128xi32>
    %52 = arith.xori %49, %51 : vector<16x128xi32>
    %c-1028477387_i32 = arith.constant -1028477387 : i32
    %53 = vector.broadcast %c-1028477387_i32 : i32 to vector<16x128xi32>
    %54 = arith.muli %52, %53 : vector<16x128xi32>
    %c16_i32_17 = arith.constant 16 : i32
    %55 = vector.broadcast %c16_i32_17 : i32 to vector<16x128xi32>
    %56 = arith.shrui %54, %55 : vector<16x128xi32>
    %57 = arith.xori %54, %56 : vector<16x128xi32>
    %c429496729_i32 = arith.constant 429496729 : i32
    %58 = vector.broadcast %c429496729_i32 : i32 to vector<16x128xi32>
    %59 = arith.cmpi uge, %57, %58 : vector<16x128xi32>
    %cst_18 = arith.constant 1.11111116 : f32
    %60 = vector.broadcast %cst_18 : f32 to vector<16x128xf32>
    %61 = arith.mulf %30, %60 : vector<16x128xf32>
    %cst_19 = arith.constant 0.000000e+00 : f32
    %62 = vector.broadcast %cst_19 : f32 to vector<16x128xf32>
    %63 = arith.select %59, %61, %62 : vector<16x128xi1>, vector<16x128xf32>
    %64 = arith.addf %0, %63 : vector<16x128xf32>
    %c0_20 = arith.constant 0 : index
    %c0_21 = arith.constant 0 : index
    %65 = vector.load %arg7[%c0_20, %c0_21] : memref<16x128xf32, #tpu.memory_space<vmem>>, vector<16x128xf32>
    tpu.vector_store %arg7[%c0_20, %c0_21], %64 {strides = array<i32>} : memref<16x128xf32, #tpu.memory_space<vmem>>, vector<16x128xf32>,
    return
  }
  func.func @transform_0(%arg0: i32, %arg1: memref<1xi32, #tpu.memory_space<smem>>) -> (i32, i32) {
    %c0_i32 = arith.constant 0 : i32
    %c0_i32_0 = arith.constant 0 : i32
    return %arg0, %c0_i32 : i32, i32
  }
  func.func @transform_1(%arg0: i32, %arg1: memref<1xi32, #tpu.memory_space<smem>>) -> (i32, i32) {
    %c0_i32 = arith.constant 0 : i32
    %c0_i32_0 = arith.constant 0 : i32
    %c0_i32_1 = arith.constant 0 : i32
    return %c0_i32, %c0_i32_0 : i32, i32
  }
  func.func @transform_2(%arg0: i32, %arg1: memref<1xi32, #tpu.memory_space<smem>>) -> (i32, i32) {
    %c0_i32 = arith.constant 0 : i32
    %c0_i32_0 = arith.constant 0 : i32
    %c0_i32_1 = arith.constant 0 : i32
    return %c0_i32, %c0_i32_0 : i32, i32
  }
  func.func @transform_3(%arg0: i32, %arg1: memref<1xi32, #tpu.memory_space<smem>>) -> (i32, i32) {
    %c0_i32 = arith.constant 0 : i32
    %c0_i32_0 = arith.constant 0 : i32
    %c0_i32_1 = arith.constant 0 : i32
    return %c0_i32, %c0_i32_0 : i32, i32
  }
  func.func @transform_4(%arg0: i32, %arg1: memref<1xi32, #tpu.memory_space<smem>>) -> (i32, i32) {
    %c0_i32 = arith.constant 0 : i32
    %c0_i32_0 = arith.constant 0 : i32
    %c0_i32_1 = arith.constant 0 : i32
    return %c0_i32, %c0_i32_0 : i32, i32
  }
  func.func @transform_5(%arg0: i32, %arg1: memref<1xi32, #tpu.memory_space<smem>>) -> (i32, i32) {
    %c0_i32 = arith.constant 0 : i32
    %c0_i32_0 = arith.constant 0 : i32
    return %arg0, %c0_i32 : i32, i32
  }
}

</mosaic_0001>

<llo_original>
// kernel: tpu_custom_call.1
$region0: #{tpu_custom_call.1}
  #allocation0 [shape = 'u32[]', space=smem, size = 0x4, offset = 0x4, fixed_abs, tag = 'smem constant byte address 0x4 - core index']
  #allocation1 [shape = 'u32[144,128]{1,0:T(1,128)}', space=vmem, size = 0x12000, scoped, tag = 'internal scratch']
  #allocation2 [shape = 's32[1]{0}', space=sflag, size = 0x4, scoped, tag = 'scoped memory for tpu_custom_call.1']
  #allocation3 [shape = 's32[1]{0:T(128)S(6)}', space=smem, size = 0x200, scoped, tag = 'prefetched SMEM operand 0']
  %s0 = inlined_call_operand.<no memory space> [shape: s32[1], index: 0, kind: input, shape index: {}]
  %s1 = inlined_call_operand.hbm [shape: f32[16,128], index: 1, kind: input, shape index: {}]
  %s2 = inlined_call_operand.vmem [shape: f32[1,128], index: 2, kind: input, shape index: {}]
  %s3 = inlined_call_operand.vmem [shape: f32[1,128], index: 3, kind: input, shape index: {}]
  %s4 = inlined_call_operand.hbm [shape: bf16[128,128], index: 4, kind: input, shape index: {}]
  %s5 = inlined_call_operand.vmem [shape: f32[1,128], index: 5, kind: input, shape index: {}]
  %s6 = inlined_call_operand.hbm [shape: f32[16,128], index: 6, kind: output, shape index: {}]
  %s7 = sld [smem:[#allocation0]]
  $region38: #{tpu_custom_call.1} parent=0
    _
  %s9 = ssub.s32 1, %s7
  %s10 = scalar_select 0, %s9, %s7
  %11 = sst [smem:[#allocation3]] %s0
  $region1: #{tpu_custom_call.1} parent=0
    #allocation4 [shape = 'u8[8192]{0}', space=vmem, size = 0x2000, scoped, tag = 'input window, operand 1, single buffered']
    #allocation5 [shape = 's32[1]{0}', space=sflag, size = 0x4, scoped, tag = 'scoped memory for tpu_custom_call.1']
    #allocation6 [shape = 's32[1]{0}', space=sflag, size = 0x4, scoped, tag = 'scoped memory for tpu_custom_call.1']
    #allocation7 [shape = 'u8[32768]{0}', space=vmem, size = 0x8000, scoped, tag = 'input window, operand 4, single buffered']
    #allocation8 [shape = 's32[1]{0}', space=sflag, size = 0x4, scoped, tag = 'scoped memory for tpu_custom_call.1']
    #allocation9 [shape = 'u8[8192]{0}', space=vmem, size = 0x2000, scoped, tag = 'output window, operand 0, single buffered']
    %12 = vsyncpa [#allocation5], 0
    %13 = vsyncpa [#allocation8], 0
    %14 = vsyncpa [#allocation6], 0
    // Predicated region
    $region2: #{tpu_custom_call.1} parent=1 // pred_check
      _
    $region3: #{tpu_custom_call.1} parent=1 // pred_check_branch
      %16 = sbr.rel (0) target = $region5
    $region4: #{tpu_custom_call.1} parent=1 // pred_region
      %s18 = ssub.s32 256, 256
      %19 = vsyncadd [#allocation5], %s18
      %s20 = sshll.u32 [#allocation4], 4
      %s21 = int_to_ptr.vmem [resolvable:$true] %s20
      %26 = dma.hbm_to_vmem [thread:$0]  %s1, 256, %s21, [#allocation5], 128, 128, 8
    $region5: #{tpu_custom_call.1} parent=1 // pred_fallthru
      _
    // Predicated region
    $region6: #{tpu_custom_call.1} parent=1 // pred_check
      _
    $region7: #{tpu_custom_call.1} parent=1 // pred_check_branch
      %28 = sbr.rel (0) target = $region9
    $region8: #{tpu_custom_call.1} parent=1 // pred_region
      _
    $region9: #{tpu_custom_call.1} parent=1 // pred_fallthru
      _
    // Predicated region
    $region10: #{tpu_custom_call.1} parent=1 // pred_check
      _
    $region11: #{tpu_custom_call.1} parent=1 // pred_check_branch
      %30 = sbr.rel (0) target = $region13
    $region12: #{tpu_custom_call.1} parent=1 // pred_region
      _
    $region13: #{tpu_custom_call.1} parent=1 // pred_fallthru
      _
    // Predicated region
    $region14: #{tpu_custom_call.1} parent=1 // pred_check
      _
    $region15: #{tpu_custom_call.1} parent=1 // pred_check_branch
      %32 = sbr.rel (0) target = $region17
    $region16: #{tpu_custom_call.1} parent=1 // pred_region
      %s34 = ssub.s32 1024, 1024
      %35 = vsyncadd [#allocation8], %s34
      %s36 = sshll.u32 [#allocation7], 4
      %s37 = int_to_ptr.vmem [resolvable:$true] %s36
      %42 = dma.hbm_to_vmem [thread:$0]  %s4, 1024, %s37, [#allocation8], 64, 64, 4
    $region17: #{tpu_custom_call.1} parent=1 // pred_fallthru
      _
    // Predicated region
    $region18: #{tpu_custom_call.1} parent=1 // pred_check
      _
    $region19: #{tpu_custom_call.1} parent=1 // pred_check_branch
      %44 = sbr.rel (0) target = $region21
    $region20: #{tpu_custom_call.1} parent=1 // pred_region
      _
    $region21: #{tpu_custom_call.1} parent=1 // pred_fallthru
      _
    // Predicated region
    $region22: #{tpu_custom_call.1} parent=1 // pred_check
      _
    $region23: #{tpu_custom_call.1} parent=1 // pred_check_branch
      %46 = sbr.rel (0) target = $region25
    $region24: #{tpu_custom_call.1} parent=1 // pred_region
      %47 = dma.done [#allocation5], 256
    $region25: #{tpu_custom_call.1} parent=1 // pred_fallthru
      _
    // Predicated region
    $region26: #{tpu_custom_call.1} parent=1 // pred_check
      _
    $region27: #{tpu_custom_call.1} parent=1 // pred_check_branch
      %49 = sbr.rel (0) target = $region29
    $region28: #{tpu_custom_call.1} parent=1 // pred_region
      %50 = dma.done [#allocation8], 1024
    $region29: #{tpu_custom_call.1} parent=1 // pred_fallthru
      _
    %v52 = vld [vmem:[#allocation4] sm:$0xff]
    %v53 = vld [vmem:[#allocation4 + $0x8] sm:$0xff]
    %54 = vadd.xlane.f32.xlu0 %v52
    %v55 = vpop.xlane.xlu0 %54
    %56 = vadd.xlane.f32.xlu0 %v53
    %v57 = vpop.xlane.xlu0 %56
    %v58 = vrcp.pop 128.0
    %v59 = vmul.f32 %v55, %v58
    %v60 = vmul.f32 %v57, %v58
    %v61 = vsub.f32 %v52, %v59
    %v62 = vsub.f32 %v53, %v60
    %v63 = vmul.f32 %v61, %v61
    %v64 = vmul.f32 %v62, %v62
    %65 = vadd.xlane.f32.xlu0 %v63
    %v66 = vpop.xlane.xlu0 %65
    %67 = vadd.xlane.f32.xlu0 %v64
    %v68 = vpop.xlane.xlu0 %67
    %v69 = vmul.f32 %v66, 0.007874016
    %v70 = vmul.f32 %v68, 0.007874016
    %v71 = vrsqrt.pop %v69
    %v72 = vmul.f32 %v69, %v71
    %vm73 = vcmp.eq.f32.partialorder %v69, inf
    %v74 = vsel %vm73, %v69, %v72
    %vm75 = vcmp.eq.f32.partialorder %v69, 0.0
    %v76 = vand.u32 %v69, 2147483648
    %v77 = vsel %vm75, %v76, %v74
    %v78 = vrsqrt.pop %v70
    %v79 = vmul.f32 %v70, %v78
    %vm80 = vcmp.eq.f32.partialorder %v70, inf
    %v81 = vsel %vm80, %v70, %v79
    %vm82 = vcmp.eq.f32.partialorder %v70, 0.0
    %v83 = vand.u32 %v70, 2147483648
    %v84 = vsel %vm82, %v83, %v81
    %v85 = vadd.f32 %v77, 1e-06
    %v86 = vadd.f32 %v84, 1e-06
    %v87 = vrcp.pop %v85
    %v88 = vmul.f32 1.0, %v87
    %v89 = vrcp.pop %v86
    %v90 = vmul.f32 1.0, %v89
    %v91 = vld [vmem:[%s2] sm:$0x1]
    %v92 = vmul.f32 %v61, %v88
    %v93 = vmul.f32 %v62, %v90
    %v95 = vlaneseq
    %v96 = vshrl.u32 %v95, 7
    %v97 = vsub.s32 0, %v96
    %v98 = vrot.slane %v91, %v97
    %v100 = vmul.f32 %v98, %v92
    %v101 = vmul.f32 %v98, %v93
    %v102 = vld [vmem:[%s3] sm:$0x1]
    %v104 = vlaneseq
    %v105 = vshrl.u32 %v104, 7
    %v106 = vsub.s32 0, %v105
    %v107 = vrot.slane %v102, %v106
    %v109 = vadd.f32 %v100, %v107
    %v110 = vadd.f32 %v101, %v107
    %v111 = vpack.c.bf16 %v110, %v109
    %v112 = vld [vmem:[#allocation7] sm:$0xf]
    %v113 = vld [vmem:[#allocation7 + $0x4] sm:$0xf]
    %v114 = vld [vmem:[#allocation7 + $0x8] sm:$0xf]
    %v115 = vld [vmem:[#allocation7 + $0xc] sm:$0xf]
    %v116 = vld [vmem:[#allocation7 + $0x10] sm:$0xf]
    %v117 = vld [vmem:[#allocation7 + $0x14] sm:$0xf]
    %v118 = vld [vmem:[#allocation7 + $0x18] sm:$0xf]
    %v119 = vld [vmem:[#allocation7 + $0x1c] sm:$0xf]
    %v120 = vld [vmem:[#allocation7 + $0x20] sm:$0xf]
    %v121 = vld [vmem:[#allocation7 + $0x24] sm:$0xf]
    %v122 = vld [vmem:[#allocation7 + $0x28] sm:$0xf]
    %v123 = vld [vmem:[#allocation7 + $0x2c] sm:$0xf]
    %v124 = vld [vmem:[#allocation7 + $0x30] sm:$0xf]
    %v125 = vld [vmem:[#allocation7 + $0x34] sm:$0xf]
    %v126 = vld [vmem:[#allocation7 + $0x38] sm:$0xf]
    %v127 = vld [vmem:[#allocation7 + $0x3c] sm:$0xf]
    %v128 = vld [vmem:[%s5] sm:$0x1]
    %v130 = vlaneseq
    %v131 = vshrl.u32 %v130, 7
    %v132 = vsub.s32 0, %v131
    %v133 = vrot.slane %v128, %v132
    %v151 = vunpack.c.l.b16 %v112
    %v152 = vunpack.c.l.b16 %v113
    %v153 = vunpack.c.l.b16 %v114
    %v154 = vunpack.c.l.b16 %v115
    %v155 = vunpack.c.l.b16 %v116
    %v156 = vunpack.c.l.b16 %v117
    %v157 = vunpack.c.l.b16 %v118
    %v158 = vunpack.c.l.b16 %v119
    %v159 = vunpack.c.l.b16 %v120
    %v160 = vunpack.c.l.b16 %v121
    %v161 = vunpack.c.l.b16 %v122
    %v162 = vunpack.c.l.b16 %v123
    %v163 = vunpack.c.l.b16 %v124
    %v164 = vunpack.c.l.b16 %v125
    %v165 = vunpack.c.l.b16 %v126
    %v166 = vunpack.c.l.b16 %v127
    %v167 = vpack.c.b16 %v152, %v151
    %v168 = vpack.c.b16 %v154, %v153
    %v169 = vpack.c.b16 %v156, %v155
    %v170 = vpack.c.b16 %v158, %v157
    %v171 = vpack.c.b16 %v160, %v159
    %v172 = vpack.c.b16 %v162, %v161
    %v173 = vpack.c.b16 %v164, %v163
    %v174 = vpack.c.b16 %v166, %v165
    %183 = vmatprep.subr.bf16.mxu0 0
    %184 = vmatpush1.bf16.msra.mxu0 %v174
    %185 = vmatprep.subr.bf16.mxu0 0
    %186 = vmatpush1.bf16.msra.mxu0 %v173
    %187 = vmatprep.subr.bf16.mxu0 0
    %188 = vmatpush1.bf16.msra.mxu0 %v172
    %189 = vmatprep.subr.bf16.mxu0 0
    %190 = vmatpush1.bf16.msra.mxu0 %v171
    %191 = vmatprep.subr.bf16.mxu0 0
    %192 = vmatpush1.bf16.msra.mxu0 %v170
    %193 = vmatprep.subr.bf16.mxu0 0
    %194 = vmatpush1.bf16.msra.mxu0 %v169
    %195 = vmatprep.subr.bf16.mxu0 0
    %196 = vmatpush1.bf16.msra.mxu0 %v168
    %197 = vmatprep.subr.bf16.mxu0 0
    %198 = vmatpush1.bf16.msra.mxu0 %v167
    %199 = vmatprep.subr.bf16.mxu0 0
    %200 = vmatpush2.bf16.msra.mxu0 0
    %201 = vmatprep.subr.bf16.mxu0 0
    %202 = vmatpush2.bf16.msra.mxu0 0
    %203 = vmatprep.subr.bf16.mxu0 0
    %204 = vmatpush2.bf16.msra.mxu0 0
    %205 = vmatprep.subr.bf16.mxu0 0
    %206 = vmatpush2.bf16.msra.mxu0 0
    %207 = vmatprep.subr.bf16.mxu0 0
    %208 = vmatpush2.bf16.msra.mxu0 0
    %209 = vmatprep.subr.bf16.mxu0 0
    %210 = vmatpush2.bf16.msra.mxu0 0
    %211 = vmatprep.subr.bf16.mxu0 0
    %212 = vmatpush2.bf16.msra.mxu0 0
    %213 = vmatprep.subr.bf16.mxu0 0
    %214 = vmatpush2.bf16.msra.mxu0 0
    %215 = vmatprep.mubr.bf16.mxu0 0
    %216 = vmatmul.mubr.bf16.gmra.mxu0 %v111
    %v217 = vpop.f32.mrf.mxu0
    %v218 = vadd.f32 %v133, %v217
    %v219 = vpop.f32.mrf.mxu0
    %v220 = vpop.f32.mrf.mxu0
    %v221 = vadd.f32 %v133, %v220
    %v222 = vpop.f32.mrf.mxu0
    %223 = vdwg.mxu0
    %s224 = sld [smem:[#allocation3]]
    %s225 = smul.u32 0, 16
    %v226 = vlaneseq
    %v227 = vshrl.u32 %v226, 7
    %v228 = vadd.s32 %v227, 8
    %v229 = vstv %s225
    %v230 = vadd.s32 %v227, %v229
    %v231 = vadd.s32 %v228, %v229
    %v232 = vlaneseq
    %v233 = vand.u32 %v232, 127
    %v234 = vmul.u32 %v230, 2654435761
    %v235 = vmul.u32 %v231, 2654435761
    %v236 = vmul.u32 %v233, 2246822519
    %v237 = vadd.s32 %v234, %v236
    %v238 = vadd.s32 %v235, %v236
    %s239 = smul.u32 %s224, 3266489917
    %v240 = vstv %s239
    %v241 = vadd.s32 %v237, %v240
    %v242 = vadd.s32 %v238, %v240
    %v243 = vshrl.u32 %v241, 16
    %v244 = vshrl.u32 %v242, 16
    %v245 = vxor.u32 %v241, %v243
    %v246 = vxor.u32 %v242, %v244
    %v247 = vmul.u32 %v245, 2246822507
    %v248 = vmul.u32 %v246, 2246822507
    %v249 = vshrl.u32 %v247, 13
    %v250 = vshrl.u32 %v248, 13
    %v251 = vxor.u32 %v247, %v249
    %v252 = vxor.u32 %v248, %v250
    %v253 = vmul.u32 %v251, 3266489909
    %v254 = vmul.u32 %v252, 3266489909
    %v255 = vshrl.u32 %v253, 16
    %v256 = vshrl.u32 %v254, 16
    %v257 = vxor.u32 %v253, %v255
    %v258 = vxor.u32 %v254, %v256
    %vm259 = vcmp.ge.u32.totalorder %v257, 429496729
    %vm260 = vcmp.ge.u32.totalorder %v258, 429496729
    %v261 = vmul.f32 %v218, 1.1111112
    %v262 = vmul.f32 %v221, 1.1111112
    %v263 = vsel %vm259, %v261, 0.0
    %v264 = vsel %vm260, %v262, 0.0
    %v265 = vadd.f32 %v52, %v263
    %v266 = vadd.f32 %v53, %v264
    %267 = vst [vmem:[#allocation9] sm:$0xff] %v265
    %268 = vst [vmem:[#allocation9 + $0x8] sm:$0xff] %v266
    // Predicated region
    $region30: #{tpu_custom_call.1} parent=1 // pred_check
      _
    $region31: #{tpu_custom_call.1} parent=1 // pred_check_branch
      %270 = sbr.rel (0) target = $region33
    $region32: #{tpu_custom_call.1} parent=1 // pred_region
      %s272 = ssub.s32 256, 256
      %273 = vsyncadd [#allocation6], %s272
      %s274 = sshll.u32 [#allocation9], 4
      %s275 = int_to_ptr.vmem [resolvable:$true] %s274
      %280 = dma.vmem_to_hbm [thread:$0]  %s275, 256, %s6, [#allocation6], 128, 128, 8
    $region33: #{tpu_custom_call.1} parent=1 // pred_fallthru
      _
    // Predicated region
    $region34: #{tpu_custom_call.1} parent=1 // pred_check
      _
    $region35: #{tpu_custom_call.1} parent=1 // pred_check_branch
      %282 = sbr.rel (0) target = $region37
    $region36: #{tpu_custom_call.1} parent=1 // pred_region
      %283 = dma.done [#allocation6], 256
    $region37: #{tpu_custom_call.1} parent=1 // pred_fallthru
      _
    %284 = vsyncpa [#allocation5], 1
    %285 = vsyncpa [#allocation8], 1
    %286 = vsyncpa [#allocation6], 1

</llo_original>
